<compile_context>
chip_gen: v7x
topology: tpu7x:2x2x1
jax: 0.10.0
libtpu: 0.0.40
codegen_flags: <defaults>
</compile_context>

<pallas_src>
import functools
import numpy as np
import jax
import jax.numpy as jnp
from jax.experimental import pallas as pl
from jax.experimental.pallas import tpu as pltpu


def _round_up(x, m):
    return (x + m - 1) // m * m


def fused_tcn_kernel(*refs, layer_cfg, K, margin, compute_dtype):
    """Entire TCN for one batch element.

    refs = (x_ref, *weight_refs, o_ref, buf_ref)
      x_ref : (1, Cin_p, Lp)   VMEM, f32
      weight_refs : per layer  w1 (Cout_p, K*Cin_p), w2 (Cout_p, K*Cout_p),
                               [wd (Cout_p, Cin_p) iff has_downsample]
      o_ref : (1, Clast_p, Lp)
      buf   : (Cmax_p, margin + Lp) f32 scratch used to realize causal shifts.
    layer_cfg: tuple of (dilation, cin_p, cout_p, has_downsample) -- static.
    """
    x_ref = refs[0]
    o_ref = refs[-2]
    buf = refs[-1]
    w_refs = refs[1:-2]

    Lp = x_ref.shape[2]
    cmax = buf.shape[0]

    # Zero the left margin once; causal reads only reach back <= margin lanes and the
    # data region [margin, margin+Lp) is what gets (re)written each conv.
    buf[pl.ds(0, cmax), pl.ds(0, margin)] = jnp.zeros((cmax, margin), jnp.float32)

    def causal_conv(v, w_ref, d, cin_p):
        # v: (cin_p, Lp) f32 value.  out[:, t] = sum_k W_k @ v[:, t - (K-1-k)*d]
        # Stage v once; each tap is a static-offset window (lane shift, no matmul).
        buf[pl.ds(0, cin_p), pl.ds(margin, Lp)] = v
        taps = [buf[pl.ds(0, cin_p), pl.ds(margin - (K - 1 - k) * d, Lp)]
                for k in range(K)]
        xs = jnp.concatenate(taps, axis=0)              # (K*cin_p, Lp) sublane-aligned
        return jnp.dot(w_ref[...].astype(compute_dtype), xs.astype(compute_dtype),
                       preferred_element_type=jnp.float32)

    h = x_ref[0].astype(jnp.float32)                    # (Cin_p, Lp)
    wi = 0
    for (d, cin_p, cout_p, has_down) in layer_cfg:      # static Python loop
        w1 = w_refs[wi]
        w2 = w_refs[wi + 1]
        wi += 2
        h1 = jnp.maximum(causal_conv(h, w1, d, cin_p), 0.0)
        h2 = jnp.maximum(causal_conv(h1, w2, d, cout_p), 0.0)
        if has_down:
            wd = w_refs[wi]
            wi += 1
            res = jnp.dot(wd[...].astype(compute_dtype), h.astype(compute_dtype),
                          preferred_element_type=jnp.float32)
        else:
            res = h                                     # identity residual: no matmul
        h = jnp.maximum(h2 + res, 0.0)                  # single fused epilogue

    o_ref[0] = h.astype(o_ref.dtype)                    # one full-lane-width store


def temporal_conv_net(x_ncl, params, *, kernel_size, compute_dtype=jnp.float32):
    """x_ncl: (B, C, L) like PyTorch; returns (B, C_last, L)."""
    B, c_in, L = x_ncl.shape
    K = kernel_size
    Lp = _round_up(L, 128)                              # lane-dense time axis
    max_shift = (K - 1) * (2 ** (len(params) - 1)) if params else 0
    margin = max(128, _round_up(max(max_shift, 1), 128))

    cin_p = _round_up(c_in, 8)
    x_p = jnp.pad(x_ncl.astype(jnp.float32),
                  ((0, 0), (0, cin_p - c_in), (0, Lp - L)))

    weights = []
    layer_cfg = []
    in_c, in_cp = c_in, cin_p
    cmax = in_cp
    for i, (w1, w2, wd) in enumerate(params):
        d = 2 ** i
        out_c = w1.shape[0]
        out_cp = _round_up(out_c, 8)
        cmax = max(cmax, out_cp)
        # Fold taps into the contraction: (Cout, Cin, K) -> (Cout_p, K*Cin_p) with
        # column index k*Cin_p + ci, matching the tap-concat order in the kernel.
        w1_p = jnp.pad(w1.astype(jnp.float32),
                       ((0, out_cp - out_c), (0, in_cp - in_c), (0, 0)))
        w2_p = jnp.pad(w2.astype(jnp.float32),
                       ((0, out_cp - out_c), (0, out_cp - out_c), (0, 0)))
        weights.append(jnp.transpose(w1_p, (0, 2, 1)).reshape(out_cp, K * in_cp))
        weights.append(jnp.transpose(w2_p, (0, 2, 1)).reshape(out_cp, K * out_cp))
        has_down = wd is not None
        if has_down:
            wd_p = jnp.pad(wd[:, :, 0].astype(jnp.float32),
                           ((0, out_cp - out_c), (0, in_cp - in_c)))
            weights.append(wd_p)
        layer_cfg.append((d, in_cp, out_cp, has_down))
        in_c, in_cp = out_c, out_cp
    out_c_last, out_cp_last = in_c, in_cp

    kernel = functools.partial(
        fused_tcn_kernel, layer_cfg=tuple(layer_cfg), K=K, margin=margin,
        compute_dtype=compute_dtype)

    out_p = pl.pallas_call(
        kernel,
        out_shape=jax.ShapeDtypeStruct((B, out_cp_last, Lp), jnp.float32),
        grid=(B,),
        in_specs=[pl.BlockSpec((1, cin_p, Lp), lambda b: (b, 0, 0))]
                 + [pl.BlockSpec(w.shape, lambda b: (0, 0)) for w in weights],
        out_specs=pl.BlockSpec((1, out_cp_last, Lp), lambda b: (b, 0, 0)),
        scratch_shapes=[pltpu.VMEM((cmax, margin + Lp), jnp.float32)],
        compiler_params=pltpu.CompilerParams(
            dimension_semantics=("parallel",),       # feeds both TCs on v7x when B>1
            vmem_limit_bytes=32 * 1024 * 1024,       # guardrail; working set is tiny
        ),
    )(x_p, *weights)
    return out_p[:, :out_c_last, :L]


# ----------------------------- parameter setup (glue) -----------------------------

def weight_norm_w(v, g):
    # v: (Cout, Cin, K), g: (Cout,)  ->  w = g * v / ||v||  (norm over dims 1,2)
    norm = jnp.sqrt(jnp.sum(v * v, axis=(1, 2), keepdims=True))
    return g[:, None, None] * v / norm


def init_params(key, num_inputs, num_channels, kernel_size):
    params = []
    in_c = num_inputs
    for i, out_c in enumerate(num_channels):
        key, k1, k2, k3, k4, k5 = jax.random.split(key, 6)
        v1 = 0.1 * jax.random.normal(k1, (out_c, in_c, kernel_size), jnp.float32)
        g1 = 0.5 + jax.random.uniform(k2, (out_c,), jnp.float32)
        v2 = 0.1 * jax.random.normal(k3, (out_c, out_c, kernel_size), jnp.float32)
        g2 = 0.5 + jax.random.uniform(k4, (out_c,), jnp.float32)
        w1 = weight_norm_w(v1, g1)                      # (Cout, Cin, K)  PyTorch layout
        w2 = weight_norm_w(v2, g2)                      # (Cout, Cout, K)
        if in_c != out_c:
            wd = 0.1 * jax.random.normal(k5, (out_c, in_c, 1), jnp.float32)
        else:
            wd = None
        params.append((w1, w2, wd))
        in_c = out_c
    return params


# ----------------------------- pure-JAX reference -----------------------------

def ref_net(x_ncl, params, *, kernel_size):
    L = x_ncl.shape[2]

    def conv(x, w, dil, pad):
        return jax.lax.conv_general_dilated(
            x, w, window_strides=(1,), padding=[(pad, pad)],
            rhs_dilation=(dil,), dimension_numbers=('NCH', 'OIH', 'NCH'))

    h = x_ncl
    for i, (w1, w2, wd) in enumerate(params):
        d = 2 ** i
        p = (kernel_size - 1) * d
        o = jnp.maximum(conv(h, w1, d, p)[:, :, :L], 0.0)
        o = jnp.maximum(conv(o, w2, d, p)[:, :, :L], 0.0)
        res = h if wd is None else conv(h, wd, 1, 0)
        h = jnp.maximum(o + res, 0.0)
    return h


if __name__ == "__main__":
    # Small shapes consistent with the module's forward (NCL input).
    B, C_in, L = 2, 4, 16
    num_channels = [8, 8, 8]
    kernel_size = 2

    key = jax.random.PRNGKey(0)
    key, kx = jax.random.split(key)
    x = jax.random.normal(kx, (B, C_in, L), jnp.float32)
    params = init_params(key, C_in, num_channels, kernel_size)

    ref = ref_net(x, params, kernel_size=kernel_size)

    # Full-precision path: tight match to the f32 reference.
    out = temporal_conv_net(x, params, kernel_size=kernel_size)
    out = jax.block_until_ready(out)
    assert out.shape == (B, num_channels[-1], L)
    np.testing.assert_allclose(np.asarray(out), np.asarray(ref), rtol=1e-3, atol=1e-3)

    # Reduced-precision MXU path (bf16 operands, f32 accumulation): loose sanity check.
    out_bf16 = temporal_conv_net(x, params, kernel_size=kernel_size,
                                 compute_dtype=jnp.bfloat16)
    out_bf16 = jax.block_until_ready(out_bf16)
    np.testing.assert_allclose(np.asarray(out_bf16), np.asarray(ref),
                               rtol=5e-2, atol=1e-1)

    print("KERNEL_OK")
</pallas_src>

<mosaic_0001>
module attributes {stable_mosaic.version = 11 : i64} {
  func.func @fused_tcn_kernel(%arg0: i32, %arg1: memref<1x8x128xf32, #tpu.memory_space<vmem>>, %arg2: memref<8x16xf32, #tpu.memory_space<vmem>>, %arg3: memref<8x16xf32, #tpu.memory_space<vmem>>, %arg4: memref<8x8xf32, #tpu.memory_space<vmem>>, %arg5: memref<8x16xf32, #tpu.memory_space<vmem>>, %arg6: memref<8x16xf32, #tpu.memory_space<vmem>>, %arg7: memref<8x16xf32, #tpu.memory_space<vmem>>, %arg8: memref<8x16xf32, #tpu.memory_space<vmem>>, %arg9: memref<1x8x128xf32, #tpu.memory_space<vmem>>, %arg10: memref<8x256xf32, #tpu.memory_space<vmem>>) attributes {dimension_semantics = [#tpu.dimension_semantics<parallel>], iteration_bounds = array<i64: 2>, scalar_prefetch = 0 : i64, scratch_operands = 1 : i64, tpu.core_type = #tpu.core_type<tc>, window_params = [{transform_indices = @transform_0, window_bounds = array<i64: 1, 8, 128>}, {pipeline_mode = #tpu.pipeline_mode<synchronous>, transform_indices = @transform_1, window_bounds = array<i64: 8, 16>}, {pipeline_mode = #tpu.pipeline_mode<synchronous>, transform_indices = @transform_2, window_bounds = array<i64: 8, 16>}, {pipeline_mode = #tpu.pipeline_mode<synchronous>, transform_indices = @transform_3, window_bounds = array<i64: 8, 8>}, {pipeline_mode = #tpu.pipeline_mode<synchronous>, transform_indices = @transform_4, window_bounds = array<i64: 8, 16>}, {pipeline_mode = #tpu.pipeline_mode<synchronous>, transform_indices = @transform_5, window_bounds = array<i64: 8, 16>}, {pipeline_mode = #tpu.pipeline_mode<synchronous>, transform_indices = @transform_6, window_bounds = array<i64: 8, 16>}, {pipeline_mode = #tpu.pipeline_mode<synchronous>, transform_indices = @transform_7, window_bounds = array<i64: 8, 16>}, {transform_indices = @transform_8, window_bounds = array<i64: 1, 8, 128>}]} {
    %cst = arith.constant 0.000000e+00 : f32
    %0 = vector.broadcast %cst : f32 to vector<8x128xf32>
    %c0 = arith.constant 0 : index
    %c0_0 = arith.constant 0 : index
    %1 = vector.load %arg10[%c0, %c0_0] : memref<8x256xf32, #tpu.memory_space<vmem>>, vector<8x128xf32>
    tpu.vector_store %arg10[%c0, %c0_0], %0 {strides = array<i32>} : memref<8x256xf32, #tpu.memory_space<vmem>>, vector<8x128xf32>,
    %c0_1 = arith.constant 0 : index
    %c0_2 = arith.constant 0 : index
    %c0_3 = arith.constant 0 : index
    %2 = vector.load %arg1[%c0_1, %c0_2, %c0_3] : memref<1x8x128xf32, #tpu.memory_space<vmem>>, vector<1x8x128xf32>
    %3 = vector.shape_cast %2 : vector<1x8x128xf32> to vector<8x128xf32>
    %c0_4 = arith.constant 0 : index
    %c128 = arith.constant 128 : index
    %4 = vector.load %arg10[%c0_4, %c128] : memref<8x256xf32, #tpu.memory_space<vmem>>, vector<8x128xf32>
    tpu.vector_store %arg10[%c0_4, %c128], %3 {strides = array<i32>} : memref<8x256xf32, #tpu.memory_space<vmem>>, vector<8x128xf32>,
    %c0_5 = arith.constant 0 : index
    %c127 = arith.constant 127 : index
    %5 = vector.load %arg10[%c0_5, %c127] : memref<8x256xf32, #tpu.memory_space<vmem>>, vector<8x128xf32>
    %c0_6 = arith.constant 0 : index
    %c128_7 = arith.constant 128 : index
    %6 = vector.load %arg10[%c0_6, %c128_7] : memref<8x256xf32, #tpu.memory_space<vmem>>, vector<8x128xf32>
    %7 = tpu.concatenate %5, %6 in 0 : vector<8x128xf32>, vector<8x128xf32> -> vector<16x128xf32>
    %c0_8 = arith.constant 0 : index
    %c0_9 = arith.constant 0 : index
    %8 = vector.load %arg2[%c0_8, %c0_9] : memref<8x16xf32, #tpu.memory_space<vmem>>, vector<8x16xf32>
    %cst_10 = arith.constant dense<0.000000e+00> : vector<8x128xf32>
    %9 = tpu.matmul %8, %7, %cst_10 {dimension_numbers = #tpu.dot_dimension_numbers<[1], [0], [0], [1], [0, 0, 1, 1], [], []>} : vector<8x16xf32>, vector<16x128xf32>, vector<8x128xf32> -> vector<8x128xf32>
    %cst_11 = arith.constant 0.000000e+00 : f32
    %10 = vector.broadcast %cst_11 : f32 to vector<8x128xf32>
    %11 = arith.maximumf %9, %10 : vector<8x128xf32>
    %c0_12 = arith.constant 0 : index
    %c128_13 = arith.constant 128 : index
    %12 = vector.load %arg10[%c0_12, %c128_13] : memref<8x256xf32, #tpu.memory_space<vmem>>, vector<8x128xf32>
    tpu.vector_store %arg10[%c0_12, %c128_13], %11 {strides = array<i32>} : memref<8x256xf32, #tpu.memory_space<vmem>>, vector<8x128xf32>,
    %c0_14 = arith.constant 0 : index
    %c127_15 = arith.constant 127 : index
    %13 = vector.load %arg10[%c0_14, %c127_15] : memref<8x256xf32, #tpu.memory_space<vmem>>, vector<8x128xf32>
    %c0_16 = arith.constant 0 : index
    %c128_17 = arith.constant 128 : index
    %14 = vector.load %arg10[%c0_16, %c128_17] : memref<8x256xf32, #tpu.memory_space<vmem>>, vector<8x128xf32>
    %15 = tpu.concatenate %13, %14 in 0 : vector<8x128xf32>, vector<8x128xf32> -> vector<16x128xf32>
    %c0_18 = arith.constant 0 : index
    %c0_19 = arith.constant 0 : index
    %16 = vector.load %arg3[%c0_18, %c0_19] : memref<8x16xf32, #tpu.memory_space<vmem>>, vector<8x16xf32>
    %cst_20 = arith.constant dense<0.000000e+00> : vector<8x128xf32>
    %17 = tpu.matmul %16, %15, %cst_20 {dimension_numbers = #tpu.dot_dimension_numbers<[1], [0], [0], [1], [0, 0, 1, 1], [], []>} : vector<8x16xf32>, vector<16x128xf32>, vector<8x128xf32> -> vector<8x128xf32>
    %cst_21 = arith.constant 0.000000e+00 : f32
    %18 = vector.broadcast %cst_21 : f32 to vector<8x128xf32>
    %19 = arith.maximumf %17, %18 : vector<8x128xf32>
    %c0_22 = arith.constant 0 : index
    %c0_23 = arith.constant 0 : index
    %20 = vector.load %arg4[%c0_22, %c0_23] : memref<8x8xf32, #tpu.memory_space<vmem>>, vector<8x8xf32>
    %cst_24 = arith.constant dense<0.000000e+00> : vector<8x128xf32>
    %21 = tpu.matmul %20, %3, %cst_24 {dimension_numbers = #tpu.dot_dimension_numbers<[1], [0], [0], [1], [0, 0, 1, 1], [], []>} : vector<8x8xf32>, vector<8x128xf32>, vector<8x128xf32> -> vector<8x128xf32>
    %22 = arith.addf %19, %21 : vector<8x128xf32>
    %cst_25 = arith.constant 0.000000e+00 : f32
    %23 = vector.broadcast %cst_25 : f32 to vector<8x128xf32>
    %24 = arith.maximumf %22, %23 : vector<8x128xf32>
    %c0_26 = arith.constant 0 : index
    %c128_27 = arith.constant 128 : index
    %25 = vector.load %arg10[%c0_26, %c128_27] : memref<8x256xf32, #tpu.memory_space<vmem>>, vector<8x128xf32>
    tpu.vector_store %arg10[%c0_26, %c128_27], %24 {strides = array<i32>} : memref<8x256xf32, #tpu.memory_space<vmem>>, vector<8x128xf32>,
    %c0_28 = arith.constant 0 : index
    %c126 = arith.constant 126 : index
    %26 = vector.load %arg10[%c0_28, %c126] : memref<8x256xf32, #tpu.memory_space<vmem>>, vector<8x128xf32>
    %c0_29 = arith.constant 0 : index
    %c128_30 = arith.constant 128 : index
    %27 = vector.load %arg10[%c0_29, %c128_30] : memref<8x256xf32, #tpu.memory_space<vmem>>, vector<8x128xf32>
    %28 = tpu.concatenate %26, %27 in 0 : vector<8x128xf32>, vector<8x128xf32> -> vector<16x128xf32>
    %c0_31 = arith.constant 0 : index
    %c0_32 = arith.constant 0 : index
    %29 = vector.load %arg5[%c0_31, %c0_32] : memref<8x16xf32, #tpu.memory_space<vmem>>, vector<8x16xf32>
    %cst_33 = arith.constant dense<0.000000e+00> : vector<8x128xf32>
    %30 = tpu.matmul %29, %28, %cst_33 {dimension_numbers = #tpu.dot_dimension_numbers<[1], [0], [0], [1], [0, 0, 1, 1], [], []>} : vector<8x16xf32>, vector<16x128xf32>, vector<8x128xf32> -> vector<8x128xf32>
    %cst_34 = arith.constant 0.000000e+00 : f32
    %31 = vector.broadcast %cst_34 : f32 to vector<8x128xf32>
    %32 = arith.maximumf %30, %31 : vector<8x128xf32>
    %c0_35 = arith.constant 0 : index
    %c128_36 = arith.constant 128 : index
    %33 = vector.load %arg10[%c0_35, %c128_36] : memref<8x256xf32, #tpu.memory_space<vmem>>, vector<8x128xf32>
    tpu.vector_store %arg10[%c0_35, %c128_36], %32 {strides = array<i32>} : memref<8x256xf32, #tpu.memory_space<vmem>>, vector<8x128xf32>,
    %c0_37 = arith.constant 0 : index
    %c126_38 = arith.constant 126 : index
    %34 = vector.load %arg10[%c0_37, %c126_38] : memref<8x256xf32, #tpu.memory_space<vmem>>, vector<8x128xf32>
    %c0_39 = arith.constant 0 : index
    %c128_40 = arith.constant 128 : index
    %35 = vector.load %arg10[%c0_39, %c128_40] : memref<8x256xf32, #tpu.memory_space<vmem>>, vector<8x128xf32>
    %36 = tpu.concatenate %34, %35 in 0 : vector<8x128xf32>, vector<8x128xf32> -> vector<16x128xf32>
    %c0_41 = arith.constant 0 : index
    %c0_42 = arith.constant 0 : index
    %37 = vector.load %arg6[%c0_41, %c0_42] : memref<8x16xf32, #tpu.memory_space<vmem>>, vector<8x16xf32>
    %cst_43 = arith.constant dense<0.000000e+00> : vector<8x128xf32>
    %38 = tpu.matmul %37, %36, %cst_43 {dimension_numbers = #tpu.dot_dimension_numbers<[1], [0], [0], [1], [0, 0, 1, 1], [], []>} : vector<8x16xf32>, vector<16x128xf32>, vector<8x128xf32> -> vector<8x128xf32>
    %cst_44 = arith.constant 0.000000e+00 : f32
    %39 = vector.broadcast %cst_44 : f32 to vector<8x128xf32>
    %40 = arith.maximumf %38, %39 : vector<8x128xf32>
    %41 = arith.addf %40, %24 : vector<8x128xf32>
    %cst_45 = arith.constant 0.000000e+00 : f32
    %42 = vector.broadcast %cst_45 : f32 to vector<8x128xf32>
    %43 = arith.maximumf %41, %42 : vector<8x128xf32>
    %c0_46 = arith.constant 0 : index
    %c128_47 = arith.constant 128 : index
    %44 = vector.load %arg10[%c0_46, %c128_47] : memref<8x256xf32, #tpu.memory_space<vmem>>, vector<8x128xf32>
    tpu.vector_store %arg10[%c0_46, %c128_47], %43 {strides = array<i32>} : memref<8x256xf32, #tpu.memory_space<vmem>>, vector<8x128xf32>,
    %c0_48 = arith.constant 0 : index
    %c124 = arith.constant 124 : index
    %45 = vector.load %arg10[%c0_48, %c124] : memref<8x256xf32, #tpu.memory_space<vmem>>, vector<8x128xf32>
    %c0_49 = arith.constant 0 : index
    %c128_50 = arith.constant 128 : index
    %46 = vector.load %arg10[%c0_49, %c128_50] : memref<8x256xf32, #tpu.memory_space<vmem>>, vector<8x128xf32>
    %47 = tpu.concatenate %45, %46 in 0 : vector<8x128xf32>, vector<8x128xf32> -> vector<16x128xf32>
    %c0_51 = arith.constant 0 : index
    %c0_52 = arith.constant 0 : index
    %48 = vector.load %arg7[%c0_51, %c0_52] : memref<8x16xf32, #tpu.memory_space<vmem>>, vector<8x16xf32>
    %cst_53 = arith.constant dense<0.000000e+00> : vector<8x128xf32>
    %49 = tpu.matmul %48, %47, %cst_53 {dimension_numbers = #tpu.dot_dimension_numbers<[1], [0], [0], [1], [0, 0, 1, 1], [], []>} : vector<8x16xf32>, vector<16x128xf32>, vector<8x128xf32> -> vector<8x128xf32>
    %cst_54 = arith.constant 0.000000e+00 : f32
    %50 = vector.broadcast %cst_54 : f32 to vector<8x128xf32>
    %51 = arith.maximumf %49, %50 : vector<8x128xf32>
    %c0_55 = arith.constant 0 : index
    %c128_56 = arith.constant 128 : index
    %52 = vector.load %arg10[%c0_55, %c128_56] : memref<8x256xf32, #tpu.memory_space<vmem>>, vector<8x128xf32>
    tpu.vector_store %arg10[%c0_55, %c128_56], %51 {strides = array<i32>} : memref<8x256xf32, #tpu.memory_space<vmem>>, vector<8x128xf32>,
    %c0_57 = arith.constant 0 : index
    %c124_58 = arith.constant 124 : index
    %53 = vector.load %arg10[%c0_57, %c124_58] : memref<8x256xf32, #tpu.memory_space<vmem>>, vector<8x128xf32>
    %c0_59 = arith.constant 0 : index
    %c128_60 = arith.constant 128 : index
    %54 = vector.load %arg10[%c0_59, %c128_60] : memref<8x256xf32, #tpu.memory_space<vmem>>, vector<8x128xf32>
    %55 = tpu.concatenate %53, %54 in 0 : vector<8x128xf32>, vector<8x128xf32> -> vector<16x128xf32>
    %c0_61 = arith.constant 0 : index
    %c0_62 = arith.constant 0 : index
    %56 = vector.load %arg8[%c0_61, %c0_62] : memref<8x16xf32, #tpu.memory_space<vmem>>, vector<8x16xf32>
    %cst_63 = arith.constant dense<0.000000e+00> : vector<8x128xf32>
    %57 = tpu.matmul %56, %55, %cst_63 {dimension_numbers = #tpu.dot_dimension_numbers<[1], [0], [0], [1], [0, 0, 1, 1], [], []>} : vector<8x16xf32>, vector<16x128xf32>, vector<8x128xf32> -> vector<8x128xf32>
    %cst_64 = arith.constant 0.000000e+00 : f32
    %58 = vector.broadcast %cst_64 : f32 to vector<8x128xf32>
    %59 = arith.maximumf %57, %58 : vector<8x128xf32>
    %60 = arith.addf %59, %43 : vector<8x128xf32>
    %cst_65 = arith.constant 0.000000e+00 : f32
    %61 = vector.broadcast %cst_65 : f32 to vector<8x128xf32>
    %62 = arith.maximumf %60, %61 : vector<8x128xf32>
    %c0_66 = arith.constant 0 : index
    %c0_67 = arith.constant 0 : index
    %c0_68 = arith.constant 0 : index
    %63 = vector.load %arg9[%c0_66, %c0_67, %c0_68] : memref<1x8x128xf32, #tpu.memory_space<vmem>>, vector<1x8x128xf32>
    %64 = vector.shape_cast %63 : vector<1x8x128xf32> to vector<8x128xf32>
    %65 = vector.shape_cast %62 : vector<8x128xf32> to vector<1x8x128xf32>
    tpu.vector_store %arg9[%c0_66, %c0_67, %c0_68], %65 {strides = array<i32>} : memref<1x8x128xf32, #tpu.memory_space<vmem>>, vector<1x8x128xf32>,
    return
  }
  func.func @transform_0(%arg0: i32) -> (i32, i32, i32) {
    %c0_i32 = arith.constant 0 : i32
    %c0_i32_0 = arith.constant 0 : i32
    %c0_i32_1 = arith.constant 0 : i32
    return %arg0, %c0_i32, %c0_i32_0 : i32, i32, i32
  }
  func.func @transform_1(%arg0: i32) -> (i32, i32) {
    %c0_i32 = arith.constant 0 : i32
    %c0_i32_0 = arith.constant 0 : i32
    %c0_i32_1 = arith.constant 0 : i32
    return %c0_i32, %c0_i32_0 : i32, i32
  }
  func.func @transform_2(%arg0: i32) -> (i32, i32) {
    %c0_i32 = arith.constant 0 : i32
    %c0_i32_0 = arith.constant 0 : i32
    %c0_i32_1 = arith.constant 0 : i32
    return %c0_i32, %c0_i32_0 : i32, i32
  }
  func.func @transform_3(%arg0: i32) -> (i32, i32) {
    %c0_i32 = arith.constant 0 : i32
    %c0_i32_0 = arith.constant 0 : i32
    %c0_i32_1 = arith.constant 0 : i32
    return %c0_i32, %c0_i32_0 : i32, i32
  }
  func.func @transform_4(%arg0: i32) -> (i32, i32) {
    %c0_i32 = arith.constant 0 : i32
    %c0_i32_0 = arith.constant 0 : i32
    %c0_i32_1 = arith.constant 0 : i32
    return %c0_i32, %c0_i32_0 : i32, i32
  }
  func.func @transform_5(%arg0: i32) -> (i32, i32) {
    %c0_i32 = arith.constant 0 : i32
    %c0_i32_0 = arith.constant 0 : i32
    %c0_i32_1 = arith.constant 0 : i32
    return %c0_i32, %c0_i32_0 : i32, i32
  }
  func.func @transform_6(%arg0: i32) -> (i32, i32) {
    %c0_i32 = arith.constant 0 : i32
    %c0_i32_0 = arith.constant 0 : i32
    %c0_i32_1 = arith.constant 0 : i32
    return %c0_i32, %c0_i32_0 : i32, i32
  }
  func.func @transform_7(%arg0: i32) -> (i32, i32) {
    %c0_i32 = arith.constant 0 : i32
    %c0_i32_0 = arith.constant 0 : i32
    %c0_i32_1 = arith.constant 0 : i32
    return %c0_i32, %c0_i32_0 : i32, i32
  }
  func.func @transform_8(%arg0: i32) -> (i32, i32, i32) {
    %c0_i32 = arith.constant 0 : i32
    %c0_i32_0 = arith.constant 0 : i32
    %c0_i32_1 = arith.constant 0 : i32
    return %arg0, %c0_i32, %c0_i32_0 : i32, i32, i32
  }
}

</mosaic_0001>

<llo_original>
// kernel: tpu_custom_call.1
$region0: #{tpu_custom_call.1}
  #allocation0 [shape = 'u32[]', space=smem, size = 0x4, offset = 0x4, fixed_abs, tag = 'smem constant byte address 0x4 - core index']
  #allocation1 [shape = 'u32[144,128]{1,0:T(1,128)}', space=vmem, size = 0x12000, scoped, tag = 'internal scratch']
  #allocation2 [shape = 'f32[8,256]{1,0:T(8,128)}', space=vmem, size = 0x2000, scoped, tag = 'scratch operand']
  %s0 = inlined_call_operand.hbm [shape: f32[2,8,128], index: 0, kind: input, shape index: {}]
  %s1 = inlined_call_operand.hbm [shape: f32[8,16], index: 1, kind: input, shape index: {}]
  %s2 = inlined_call_operand.hbm [shape: f32[8,16], index: 2, kind: input, shape index: {}]
  %s3 = inlined_call_operand.vmem [shape: f32[8,8], index: 3, kind: input, shape index: {}]
  %s4 = inlined_call_operand.hbm [shape: f32[8,16], index: 4, kind: input, shape index: {}]
  %s5 = inlined_call_operand.vmem [shape: f32[8,16], index: 5, kind: input, shape index: {}]
  %s6 = inlined_call_operand.hbm [shape: f32[8,16], index: 6, kind: input, shape index: {}]
  %s7 = inlined_call_operand.vmem [shape: f32[8,16], index: 7, kind: input, shape index: {}]
  %s8 = inlined_call_operand.hbm [shape: f32[2,8,128], index: 8, kind: output, shape index: {}]
  %s9 = sld [smem:[#allocation0]]
  $region85: #{tpu_custom_call.1} parent=0
    _
  %s11 = ssub.s32 1, %s9
  %s12 = scalar_select 0, %s11, %s9
  $region1: #{tpu_custom_call.1} parent=0
    #allocation3 [shape = 'u8[8192]{0}', space=vmem, size = 0x2000, scoped, tag = 'input window, operand 0']
    #allocation4 [shape = 's32[2]{0}', space=sflag, size = 0x8, scoped, tag = 'scoped memory for tpu_custom_call.1']
    #allocation5 [shape = 's32[2]{0}', space=sflag, size = 0x8, scoped, tag = 'scoped memory for tpu_custom_call.1']
    #allocation6 [shape = 'u8[4096]{0}', space=vmem, size = 0x1000, scoped, tag = 'input window, operand 1, single buffered']
    #allocation7 [shape = 's32[1]{0}', space=sflag, size = 0x4, scoped, tag = 'scoped memory for tpu_custom_call.1']
    #allocation8 [shape = 'u8[4096]{0}', space=vmem, size = 0x1000, scoped, tag = 'input window, operand 2, single buffered']
    #allocation9 [shape = 'u8[4096]{0}', space=vmem, size = 0x1000, scoped, tag = 'input window, operand 4, single buffered']
    #allocation10 [shape = 's32[1]{0}', space=sflag, size = 0x4, scoped, tag = 'scoped memory for tpu_custom_call.1']
    #allocation11 [shape = 'u8[4096]{0}', space=vmem, size = 0x1000, scoped, tag = 'input window, operand 6, single buffered']
    #allocation12 [shape = 'u8[8192]{0}', space=vmem, size = 0x2000, scoped, tag = 'output window, operand 0']
    %13 = vsyncpa [#allocation4], 0
    %s14 = scalar_lea.sflag [#allocation4], 1
    %15 = vsyncpa %s14, 0
    %16 = vsyncpa [#allocation7], 0
    %17 = vsyncpa [#allocation10], 0
    %18 = vsyncpa [#allocation5], 0
    %s19 = scalar_lea.sflag [#allocation5], 1
    %20 = vsyncpa %s19, 0
    loop: start=0, step=1, limit=4
    $region2: #{tpu_custom_call.1} parent=1 // loop_pre_header
      _
    $region3: #{tpu_custom_call.1} parent=1 // loop_header
      %s22 = sphi 0, %s26
      %p23 = scmp.ge.s32.totalorder %s22, 4
      %s32 = sphi 0, %s34
      %s35 = sphi 0, %s32
      %s36 = sphi 0, %s35
      %s52 = sphi 0, %s36
      %s56 = sphi 0, %s56
      %s58 = sphi 0, %s56
      %s59 = sphi 0, %s58
      %s73 = sphi 0, %s59
      %s77 = sphi 0, %s77
      %s79 = sphi 0, %s77
      %s80 = sphi 0, %s79
      %s94 = sphi 0, %s80
      %s98 = sphi 0, %s98
      %s100 = sphi 0, %s98
      %s101 = sphi 0, %s100
      %s115 = sphi 0, %s101
      %s119 = sphi 0, %s119
      %s121 = sphi 0, %s119
      %s122 = sphi 0, %s121
      %s136 = sphi 0, %s122
      %s140 = sphi 0, %s140
      %s142 = sphi 0, %s140
      %s143 = sphi 0, %s142
      %s157 = sphi 0, %s143
      %s161 = sphi 0, %s161
      %s163 = sphi 0, %s161
      %s164 = sphi 0, %s163
      %s178 = sphi 0, %s164
      %s182 = sphi 0, %s182
      %s184 = sphi 0, %s182
      %s185 = sphi 0, %s184
      %s199 = sphi 0, %s185
      %s205 = sphi 0, %s207
      %s208 = sphi 0, %s205
      %s209 = sphi 0, %s208
      %s225 = sphi 0, %s209
    $region4: #{tpu_custom_call.1} parent=1 // loop_header_branch
      %25 = sbr.rel (%p23) target = $region8
    $region5: #{tpu_custom_call.1} parent=1 // loop_body
      %s27 = ssub.s32 %s22, 1
      %s28 = ssub.s32 %s22, 2
      %s29 = sadd.s32 %s22, 1
      %s30 = ssub.s32 %s22, %s29
      %p31 = scmp.eq.s32.totalorder %s30, 0
      %s33 = sadd.s32 %s32, 1
      %s34 = scalar_select %p31, %s32, %s33
      %p37 = pneg %p31
      %p38 = scmp.eq.s32.totalorder %s22, 1
      %p39 = por %p37, %p38
      %p40 = scmp.ne.s32.totalorder %s32, %s35
      %p41 = scmp.eq.s32.totalorder %s22, 0
      %p42 = por %p40, %p41
      %p43 = scmp.ne.s32.totalorder %s32, %s35
      %p44 = scmp.eq.s32.totalorder %s27, 1
      %p45 = por %p43, %p44
      %p46 = scmp.ne.s32.totalorder %s35, %s36
      %p47 = scmp.eq.s32.totalorder %s27, 0
      %p48 = por %p46, %p47
      %p49 = scmp.ne.s32.totalorder %s35, %s36
      %p50 = scmp.eq.s32.totalorder %s28, 1
      %p51 = por %p49, %p50
      %p53 = scmp.ne.s32.totalorder %s36, %s52
      %p54 = scmp.eq.s32.totalorder %s28, 0
      %p55 = por %p53, %p54
      %s57 = sadd.s32 %s56, 1
      %p60 = scmp.eq.s32.totalorder %s22, 1
      %p61 = scmp.ne.s32.totalorder %s56, %s58
      %p62 = scmp.eq.s32.totalorder %s22, 0
      %p63 = por %p61, %p62
      %p64 = scmp.ne.s32.totalorder %s56, %s58
      %p65 = scmp.eq.s32.totalorder %s27, 1
      %p66 = por %p64, %p65
      %p67 = scmp.ne.s32.totalorder %s58, %s59
      %p68 = scmp.eq.s32.totalorder %s27, 0
      %p69 = por %p67, %p68
      %p70 = scmp.ne.s32.totalorder %s58, %s59
      %p71 = scmp.eq.s32.totalorder %s28, 1
      %p72 = por %p70, %p71
      %p74 = scmp.ne.s32.totalorder %s59, %s73
      %p75 = scmp.eq.s32.totalorder %s28, 0
      %p76 = por %p74, %p75
      %s78 = sadd.s32 %s77, 1
      %p81 = scmp.eq.s32.totalorder %s22, 1
      %p82 = scmp.ne.s32.totalorder %s77, %s79
      %p83 = scmp.eq.s32.totalorder %s22, 0
      %p84 = por %p82, %p83
      %p85 = scmp.ne.s32.totalorder %s77, %s79
      %p86 = scmp.eq.s32.totalorder %s27, 1
      %p87 = por %p85, %p86
      %p88 = scmp.ne.s32.totalorder %s79, %s80
      %p89 = scmp.eq.s32.totalorder %s27, 0
      %p90 = por %p88, %p89
      %p91 = scmp.ne.s32.totalorder %s79, %s80
      %p92 = scmp.eq.s32.totalorder %s28, 1
      %p93 = por %p91, %p92
      %p95 = scmp.ne.s32.totalorder %s80, %s94
      %p96 = scmp.eq.s32.totalorder %s28, 0
      %p97 = por %p95, %p96
      %s99 = sadd.s32 %s98, 1
      %p102 = scmp.eq.s32.totalorder %s22, 1
      %p103 = scmp.ne.s32.totalorder %s98, %s100
      %p104 = scmp.eq.s32.totalorder %s22, 0
      %p105 = por %p103, %p104
      %p106 = scmp.ne.s32.totalorder %s98, %s100
      %p107 = scmp.eq.s32.totalorder %s27, 1
      %p108 = por %p106, %p107
      %p109 = scmp.ne.s32.totalorder %s100, %s101
      %p110 = scmp.eq.s32.totalorder %s27, 0
      %p111 = por %p109, %p110
      %p112 = scmp.ne.s32.totalorder %s100, %s101
      %p113 = scmp.eq.s32.totalorder %s28, 1
      %p114 = por %p112, %p113
      %p116 = scmp.ne.s32.totalorder %s101, %s115
      %p117 = scmp.eq.s32.totalorder %s28, 0
      %p118 = por %p116, %p117
      %s120 = sadd.s32 %s119, 1
      %p123 = scmp.eq.s32.totalorder %s22, 1
      %p124 = scmp.ne.s32.totalorder %s119, %s121
      %p125 = scmp.eq.s32.totalorder %s22, 0
      %p126 = por %p124, %p125
      %p127 = scmp.ne.s32.totalorder %s119, %s121
      %p128 = scmp.eq.s32.totalorder %s27, 1
      %p129 = por %p127, %p128
      %p130 = scmp.ne.s32.totalorder %s121, %s122
      %p131 = scmp.eq.s32.totalorder %s27, 0
      %p132 = por %p130, %p131
      %p133 = scmp.ne.s32.totalorder %s121, %s122
      %p134 = scmp.eq.s32.totalorder %s28, 1
      %p135 = por %p133, %p134
      %p137 = scmp.ne.s32.totalorder %s122, %s136
      %p138 = scmp.eq.s32.totalorder %s28, 0
      %p139 = por %p137, %p138
      %s141 = sadd.s32 %s140, 1
      %p144 = scmp.eq.s32.totalorder %s22, 1
      %p145 = scmp.ne.s32.totalorder %s140, %s142
      %p146 = scmp.eq.s32.totalorder %s22, 0
      %p147 = por %p145, %p146
      %p148 = scmp.ne.s32.totalorder %s140, %s142
      %p149 = scmp.eq.s32.totalorder %s27, 1
      %p150 = por %p148, %p149
      %p151 = scmp.ne.s32.totalorder %s142, %s143
      %p152 = scmp.eq.s32.totalorder %s27, 0
      %p153 = por %p151, %p152
      %p154 = scmp.ne.s32.totalorder %s142, %s143
      %p155 = scmp.eq.s32.totalorder %s28, 1
      %p156 = por %p154, %p155
      %p158 = scmp.ne.s32.totalorder %s143, %s157
      %p159 = scmp.eq.s32.totalorder %s28, 0
      %p160 = por %p158, %p159
      %s162 = sadd.s32 %s161, 1
      %p165 = scmp.eq.s32.totalorder %s22, 1
      %p166 = scmp.ne.s32.totalorder %s161, %s163
      %p167 = scmp.eq.s32.totalorder %s22, 0
      %p168 = por %p166, %p167
      %p169 = scmp.ne.s32.totalorder %s161, %s163
      %p170 = scmp.eq.s32.totalorder %s27, 1
      %p171 = por %p169, %p170
      %p172 = scmp.ne.s32.totalorder %s163, %s164
      %p173 = scmp.eq.s32.totalorder %s27, 0
      %p174 = por %p172, %p173
      %p175 = scmp.ne.s32.totalorder %s163, %s164
      %p176 = scmp.eq.s32.totalorder %s28, 1
      %p177 = por %p175, %p176
      %p179 = scmp.ne.s32.totalorder %s164, %s178
      %p180 = scmp.eq.s32.totalorder %s28, 0
      %p181 = por %p179, %p180
      %s183 = sadd.s32 %s182, 1
      %p186 = scmp.eq.s32.totalorder %s22, 1
      %p187 = scmp.ne.s32.totalorder %s182, %s184
      %p188 = scmp.eq.s32.totalorder %s22, 0
      %p189 = por %p187, %p188
      %p190 = scmp.ne.s32.totalorder %s182, %s184
      %p191 = scmp.eq.s32.totalorder %s27, 1
      %p192 = por %p190, %p191
      %p193 = scmp.ne.s32.totalorder %s184, %s185
      %p194 = scmp.eq.s32.totalorder %s27, 0
      %p195 = por %p193, %p194
      %p196 = scmp.ne.s32.totalorder %s184, %s185
      %p197 = scmp.eq.s32.totalorder %s28, 1
      %p198 = por %p196, %p197
      %p200 = scmp.ne.s32.totalorder %s185, %s199
      %p201 = scmp.eq.s32.totalorder %s28, 0
      %p202 = por %p200, %p201
      %s203 = ssub.s32 %s22, %s29
      %p204 = scmp.eq.s32.totalorder %s203, 0
      %s206 = sadd.s32 %s205, 1
      %s207 = scalar_select %p204, %s205, %s206
      %p210 = pneg %p204
      %p211 = scmp.eq.s32.totalorder %s22, 1
      %p212 = por %p210, %p211
      %p213 = scmp.ne.s32.totalorder %s205, %s208
      %p214 = scmp.eq.s32.totalorder %s22, 0
      %p215 = por %p213, %p214
      %p216 = scmp.ne.s32.totalorder %s205, %s208
      %p217 = scmp.eq.s32.totalorder %s27, 1
      %p218 = por %p216, %p217
      %p219 = scmp.ne.s32.totalorder %s208, %s209
      %p220 = scmp.eq.s32.totalorder %s27, 0
      %p221 = por %p219, %p220
      %p222 = scmp.ne.s32.totalorder %s208, %s209
      %p223 = scmp.eq.s32.totalorder %s28, 1
      %p224 = por %p222, %p223
      %p226 = scmp.ne.s32.totalorder %s209, %s225
      %p227 = scmp.eq.s32.totalorder %s28, 0
      %p228 = por %p226, %p227
      %p229 = scmp.le.s32.totalorder 1, %s22
      %p230 = scmp.lt.s32.totalorder %s22, 3
      %p231 = pnand %p229, %p230
      %p232 = pneg %p231
      // Predicated region
      $region9: #{tpu_custom_call.1} parent=5 // pred_check
        _
      $region10: #{tpu_custom_call.1} parent=5 // pred_check_branch
        %234 = sbr.rel (%p231) target = $region12
      $region11: #{tpu_custom_call.1} parent=5 // pred_region
        %s235 = ssub.s32 %s22, 1
        // Predicated region
        $region13: #{tpu_custom_call.1} parent=11 // pred_check
          %p236 = pneg %p69
        $region14: #{tpu_custom_call.1} parent=11 // pred_check_branch
          %238 = sbr.rel (%p236) target = $region16
        $region15: #{tpu_custom_call.1} parent=11 // pred_region
          %s240 = ssub.s32 128, 128
          %241 = vsyncadd [#allocation7], %s240
          %s243 = sshll.u32 [#allocation6], 4
          %s244 = int_to_ptr.vmem [resolvable:$true] %s243
          %246 = dma.hbm_to_vmem [thread:$0]  %s1, 128, %s244, [#allocation7]
        $region16: #{tpu_custom_call.1} parent=11 // pred_fallthru
          _
        // Predicated region
        $region17: #{tpu_custom_call.1} parent=11 // pred_check
          %p247 = pneg %p90
        $region18: #{tpu_custom_call.1} parent=11 // pred_check_branch
          %249 = sbr.rel (%p247) target = $region20
        $region19: #{tpu_custom_call.1} parent=11 // pred_region
          %s251 = ssub.s32 128, 128
          %252 = vsyncadd [#allocation7], %s251
          %s254 = sshll.u32 [#allocation8], 4
          %s255 = int_to_ptr.vmem [resolvable:$true] %s254
          %257 = dma.hbm_to_vmem [thread:$0]  %s2, 128, %s255, [#allocation7]
        $region20: #{tpu_custom_call.1} parent=11 // pred_fallthru
          _
        // Predicated region
        $region21: #{tpu_custom_call.1} parent=11 // pred_check
          %p258 = pneg %p111
        $region22: #{tpu_custom_call.1} parent=11 // pred_check_branch
          %260 = sbr.rel (%p258) target = $region24
        $region23: #{tpu_custom_call.1} parent=11 // pred_region
          _
        $region24: #{tpu_custom_call.1} parent=11 // pred_fallthru
          _
        // Predicated region
        $region25: #{tpu_custom_call.1} parent=11 // pred_check
          %p261 = pneg %p132
        $region26: #{tpu_custom_call.1} parent=11 // pred_check_branch
          %263 = sbr.rel (%p261) target = $region28
        $region27: #{tpu_custom_call.1} parent=11 // pred_region
          %s265 = ssub.s32 128, 128
          %266 = vsyncadd [#allocation10], %s265
          %s268 = sshll.u32 [#allocation9], 4
          %s269 = int_to_ptr.vmem [resolvable:$true] %s268
          %271 = dma.hbm_to_vmem [thread:$0]  %s4, 128, %s269, [#allocation10]
        $region28: #{tpu_custom_call.1} parent=11 // pred_fallthru
          _
        // Predicated region
        $region29: #{tpu_custom_call.1} parent=11 // pred_check
          %p272 = pneg %p153
        $region30: #{tpu_custom_call.1} parent=11 // pred_check_branch
          %274 = sbr.rel (%p272) target = $region32
        $region31: #{tpu_custom_call.1} parent=11 // pred_region
          _
        $region32: #{tpu_custom_call.1} parent=11 // pred_fallthru
          _
        // Predicated region
        $region33: #{tpu_custom_call.1} parent=11 // pred_check
          %p275 = pneg %p174
        $region34: #{tpu_custom_call.1} parent=11 // pred_check_branch
          %277 = sbr.rel (%p275) target = $region36
        $region35: #{tpu_custom_call.1} parent=11 // pred_region
          %s279 = ssub.s32 128, 128
          %280 = vsyncadd [#allocation10], %s279
          %s282 = sshll.u32 [#allocation11], 4
          %s283 = int_to_ptr.vmem [resolvable:$true] %s282
          %285 = dma.hbm_to_vmem [thread:$0]  %s6, 128, %s283, [#allocation10]
        $region36: #{tpu_custom_call.1} parent=11 // pred_fallthru
          _
        // Predicated region
        $region37: #{tpu_custom_call.1} parent=11 // pred_check
          %p286 = pneg %p195
        $region38: #{tpu_custom_call.1} parent=11 // pred_check_branch
          %288 = sbr.rel (%p286) target = $region40
        $region39: #{tpu_custom_call.1} parent=11 // pred_region
          _
        $region40: #{tpu_custom_call.1} parent=11 // pred_fallthru
          _
      $region12: #{tpu_custom_call.1} parent=5 // pred_fallthru
        _
      %p289 = scmp.lt.s32.totalorder %s22, 2
      // Predicated region
      $region41: #{tpu_custom_call.1} parent=5 // pred_check
        %p290 = pneg %p289
      $region42: #{tpu_custom_call.1} parent=5 // pred_check_branch
        %292 = sbr.rel (%p290) target = $region44
      $region43: #{tpu_custom_call.1} parent=5 // pred_region
        // Predicated region
        $region45: #{tpu_custom_call.1} parent=43 // pred_check
          %p293 = pneg %p42
        $region46: #{tpu_custom_call.1} parent=43 // pred_check_branch
          %295 = sbr.rel (%p293) target = $region48
        $region47: #{tpu_custom_call.1} parent=43 // pred_region
          %s296 = sand.u32 %s32, 1
          %s297 = scalar_lea.sflag [#allocation4], %s296
          %s298 = sand.u32 %s32, 1
          %s299 = smul.addr %s298, 8
          %s300 = scalar_lea.vmem [#allocation3], %s299
          %s302 = ssub.s32 128, 128
          %303 = vsyncadd %s297, %s302
          %s304 = smul.addr %s22, 128
          %s305 = scalar_lea.hbm %s0, %s304
          %s307 = sshll.u32 %s300, 4
          %s308 = int_to_ptr.vmem [resolvable:$true] %s307
          %310 = dma.hbm_to_vmem [thread:$0]  %s305, 128, %s308, %s297
        $region48: #{tpu_custom_call.1} parent=43 // pred_fallthru
          _
      $region44: #{tpu_custom_call.1} parent=5 // pred_fallthru
        _
      %p311 = scmp.le.s32.totalorder 1, %s22
      %p312 = scmp.lt.s32.totalorder %s22, 3
      %p313 = pnand %p311, %p312
      %p314 = pneg %p313
      // Predicated region
      $region49: #{tpu_custom_call.1} parent=5 // pred_check
        _
      $region50: #{tpu_custom_call.1} parent=5 // pred_check_branch
        %316 = sbr.rel (%p313) target = $region52
      $region51: #{tpu_custom_call.1} parent=5 // pred_region
        %s317 = ssub.s32 %s22, 1
        %s318 = sand.u32 %s35, 1
        %s319 = scalar_lea.sflag [#allocation4], %s318
        %s320 = sand.u32 %s35, 1
        %s321 = smul.addr %s320, 8
        %s322 = scalar_lea.vmem [#allocation3], %s321
        // Predicated region
        $region53: #{tpu_custom_call.1} parent=51 // pred_check
          %p323 = pneg %p48
        $region54: #{tpu_custom_call.1} parent=51 // pred_check_branch
          %325 = sbr.rel (%p323) target = $region56
        $region55: #{tpu_custom_call.1} parent=51 // pred_region
          %326 = dma.done %s319, 128
        $region56: #{tpu_custom_call.1} parent=51 // pred_fallthru
          _
        // Predicated region
        $region57: #{tpu_custom_call.1} parent=51 // pred_check
          %p327 = pneg %p69
        $region58: #{tpu_custom_call.1} parent=51 // pred_check_branch
          %329 = sbr.rel (%p327) target = $region60
        $region59: #{tpu_custom_call.1} parent=51 // pred_region
          %330 = dma.done [#allocation7], 128
        $region60: #{tpu_custom_call.1} parent=51 // pred_fallthru
          _
        // Predicated region
        $region61: #{tpu_custom_call.1} parent=51 // pred_check
          %p331 = pneg %p90
        $region62: #{tpu_custom_call.1} parent=51 // pred_check_branch
          %333 = sbr.rel (%p331) target = $region64
        $region63: #{tpu_custom_call.1} parent=51 // pred_region
          %334 = dma.done [#allocation7], 128
        $region64: #{tpu_custom_call.1} parent=51 // pred_fallthru
          _
        // Predicated region
        $region65: #{tpu_custom_call.1} parent=51 // pred_check
          %p335 = pneg %p132
        $region66: #{tpu_custom_call.1} parent=51 // pred_check_branch
          %337 = sbr.rel (%p335) target = $region68
        $region67: #{tpu_custom_call.1} parent=51 // pred_region
          %338 = dma.done [#allocation10], 128
        $region68: #{tpu_custom_call.1} parent=51 // pred_fallthru
          _
        // Predicated region
        $region69: #{tpu_custom_call.1} parent=51 // pred_check
          %p339 = pneg %p174
        $region70: #{tpu_custom_call.1} parent=51 // pred_check_branch
          %341 = sbr.rel (%p339) target = $region72
        $region71: #{tpu_custom_call.1} parent=51 // pred_region
          %342 = dma.done [#allocation10], 128
        $region72: #{tpu_custom_call.1} parent=51 // pred_fallthru
          _
        %s343 = sand.u32 %s35, 1
        %s344 = scalar_lea.sflag [#allocation4], %s343
        %s345 = sand.u32 %s35, 1
        %s346 = smul.addr %s345, 8
        %s347 = scalar_lea.vmem [#allocation3], %s346
        %p348 = pneg %p48
        %p349 = pneg %p45
        %p350 = pneg %p69
        %p351 = pneg %p66
        %p352 = pneg %p90
        %p353 = pneg %p87
        %p354 = pneg %p111
        %p355 = pneg %p108
        %p356 = pneg %p132
        %p357 = pneg %p129
        %p358 = pneg %p153
        %p359 = pneg %p150
        %p360 = pneg %p174
        %p361 = pneg %p171
        %p362 = pneg %p195
        %p363 = pneg %p192
        %p364 = pneg %p221
        %p365 = pneg %p218
        %s366 = sand.u32 %s208, 1
        %s367 = scalar_lea.sflag [#allocation5], %s366
        %s368 = sand.u32 %s208, 1
        %s369 = smul.addr %s368, 8
        %s370 = scalar_lea.vmem [#allocation12], %s369
        %371 = vst [vmem:[#allocation2] sm:$0xff] 0.0
        %v372 = vld [vmem:[%s322] sm:$0xff]
        %373 = vst [vmem:[#allocation2 + $0x8] sm:$0xff] %v372
        %v374 = vld [vmem:[#allocation2] sm:$0xff]
        %v375 = vld [vmem:[#allocation2 + $0x8] sm:$0xff]
        %377 = vrot.lane.b32.xlu0 %v375, 127
        %v378 = vpop.permute.xlu0 %377
        %v379 = vld [vmem:[#allocation6] sm:$0xff]
        %381 = vrot.lane.b32.xlu0 %v374, 1
        %v382 = vpop.permute.xlu0 %381
        %383 = vrot.lane.b32.xlu0 %v375, 1
        %v384 = vpop.permute.xlu0 %383
        %385 = vrot.lane.b32.xlu0 %v378, 1
        %v386 = vpop.permute.xlu0 %385
        %vm387 = vcmask 7168
        %v388 = vsel %vm387, %v382, %v384
        %vm391 = vcmask 130048
        %v393 = vsel %vm391, %v379, 0
        %395 = vmatprep.subr.mxu0 0.0
        %396 = vmatpush1.msra.mxu0 %v388
        %397 = vmatprep.subr.mxu0 0.0
        %398 = vmatpush1.msra.mxu0 %v386
        %399 = vmatprep.subr.mxu0 0.0
        %400 = vmatpush1.msra.mxu0 0.0
        %401 = vmatprep.subr.mxu0 0.0
        %402 = vmatpush1.msra.mxu0 0.0
        %403 = vmatprep.subr.mxu0 0.0
        %404 = vmatpush1.msra.mxu0 0.0
        %405 = vmatprep.subr.mxu0 0.0
        %406 = vmatpush1.msra.mxu0 0.0
        %407 = vmatprep.subr.mxu0 0.0
        %408 = vmatpush1.msra.mxu0 0.0
        %409 = vmatprep.subr.mxu0 0.0
        %410 = vmatpush1.msra.mxu0 0.0
        %411 = vmatprep.subr.mxu0 0.0
        %412 = vmatpush1.msra.mxu0 0.0
        %413 = vmatprep.subr.mxu0 0.0
        %414 = vmatpush1.msra.mxu0 0.0
        %415 = vmatprep.subr.mxu0 0.0
        %416 = vmatpush1.msra.mxu0 0.0
        %417 = vmatprep.subr.mxu0 0.0
        %418 = vmatpush1.msra.mxu0 0.0
        %419 = vmatprep.subr.mxu0 0.0
        %420 = vmatpush1.msra.mxu0 0.0
        %421 = vmatprep.subr.mxu0 0.0
        %422 = vmatpush1.msra.mxu0 0.0
        %423 = vmatprep.subr.mxu0 0.0
        %424 = vmatpush1.msra.mxu0 0.0
        %425 = vmatprep.subr.mxu0 0.0
        %426 = vmatpush1.msra.mxu0 0.0
        %427 = vmatprep.subr.mxu0 0.0
        %428 = vmatpush1.msra.mxu0 0.0
        %429 = vmatprep.subr.mxu0 0.0
        %430 = vmatpush1.msra.mxu0 0.0
        %431 = vmatprep.subr.mxu0 0.0
        %432 = vmatpush1.msra.mxu0 0.0
        %433 = vmatprep.subr.mxu0 0.0
        %434 = vmatpush1.msra.mxu0 0.0
        %435 = vmatprep.subr.mxu0 0.0
        %436 = vmatpush1.msra.mxu0 0.0
        %437 = vmatprep.subr.mxu0 0.0
        %438 = vmatpush1.msra.mxu0 0.0
        %439 = vmatprep.subr.mxu0 0.0
        %440 = vmatpush1.msra.mxu0 0.0
        %441 = vmatprep.subr.mxu0 0.0
        %442 = vmatpush1.msra.mxu0 0.0
        %443 = vmatprep.subr.mxu0 0.0
        %444 = vmatpush1.msra.mxu0 0.0
        %445 = vmatprep.subr.mxu0 0.0
        %446 = vmatpush1.msra.mxu0 0.0
        %447 = vmatprep.subr.mxu0 0.0
        %448 = vmatpush1.msra.mxu0 0.0
        %449 = vmatprep.subr.mxu0 0.0
        %450 = vmatpush1.msra.mxu0 0.0
        %451 = vmatprep.subr.mxu0 0.0
        %452 = vmatpush1.msra.mxu0 0.0
        %453 = vmatprep.subr.mxu0 0.0
        %454 = vmatpush1.msra.mxu0 0.0
        %455 = vmatprep.subr.mxu0 0.0
        %456 = vmatpush1.msra.mxu0 0.0
        %457 = vmatprep.subr.mxu0 0.0
        %458 = vmatpush1.msra.mxu0 0.0
        %459 = vmatprep.mubr.f32.mxu0 0.0
        %460 = vmatmul.mubr.f32.gmra.mrb[0].mxu0 %v393
        %v461 = vpop.f32.mrb[0].mxu0
        %v462 = vadd.f32 0.0, %v461
        %v463 = vpop.f32.mrb[0].mxu0
        %464 = vdwg.mxu0
        %v465 = vmax.f32 %v462, 0.0
        %466 = vst [vmem:[#allocation2 + $0x8] sm:$0xff] %v465
        %v467 = vld [vmem:[#allocation2] sm:$0xff]
        %v468 = vld [vmem:[#allocation2 + $0x8] sm:$0xff]
        %470 = vrot.lane.b32.xlu0 %v468, 127
        %v471 = vpop.permute.xlu0 %470
        %v472 = vld [vmem:[#allocation8] sm:$0xff]
        %474 = vrot.lane.b32.xlu0 %v467, 1
        %v475 = vpop.permute.xlu0 %474
        %476 = vrot.lane.b32.xlu0 %v468, 1
        %v477 = vpop.permute.xlu0 %476
        %478 = vrot.lane.b32.xlu0 %v471, 1
        %v479 = vpop.permute.xlu0 %478
        %v480 = vsel %vm387, %v475, %v477
        %v484 = vsel %vm391, %v472, 0
        %486 = vmatprep.subr.mxu0 0.0
        %487 = vmatpush1.msra.mxu0 %v480
        %488 = vmatprep.subr.mxu0 0.0
        %489 = vmatpush1.msra.mxu0 %v479
        %490 = vmatprep.subr.mxu0 0.0
        %491 = vmatpush1.msra.mxu0 0.0
        %492 = vmatprep.subr.mxu0 0.0
        %493 = vmatpush1.msra.mxu0 0.0
        %494 = vmatprep.subr.mxu0 0.0
        %495 = vmatpush1.msra.mxu0 0.0
        %496 = vmatprep.subr.mxu0 0.0
        %497 = vmatpush1.msra.mxu0 0.0
        %498 = vmatprep.subr.mxu0 0.0
        %499 = vmatpush1.msra.mxu0 0.0
        %500 = vmatprep.subr.mxu0 0.0
        %501 = vmatpush1.msra.mxu0 0.0
        %502 = vmatprep.subr.mxu0 0.0
        %503 = vmatpush1.msra.mxu0 0.0
        %504 = vmatprep.subr.mxu0 0.0
        %505 = vmatpush1.msra.mxu0 0.0
        %506 = vmatprep.subr.mxu0 0.0
        %507 = vmatpush1.msra.mxu0 0.0
        %508 = vmatprep.subr.mxu0 0.0
        %509 = vmatpush1.msra.mxu0 0.0
        %510 = vmatprep.subr.mxu0 0.0
        %511 = vmatpush1.msra.mxu0 0.0
        %512 = vmatprep.subr.mxu0 0.0
        %513 = vmatpush1.msra.mxu0 0.0
        %514 = vmatprep.subr.mxu0 0.0
        %515 = vmatpush1.msra.mxu0 0.0
        %516 = vmatprep.subr.mxu0 0.0
        %517 = vmatpush1.msra.mxu0 0.0
        %518 = vmatprep.subr.mxu0 0.0
        %519 = vmatpush1.msra.mxu0 0.0
        %520 = vmatprep.subr.mxu0 0.0
        %521 = vmatpush1.msra.mxu0 0.0
        %522 = vmatprep.subr.mxu0 0.0
        %523 = vmatpush1.msra.mxu0 0.0
        %524 = vmatprep.subr.mxu0 0.0
        %525 = vmatpush1.msra.mxu0 0.0
        %526 = vmatprep.subr.mxu0 0.0
        %527 = vmatpush1.msra.mxu0 0.0
        %528 = vmatprep.subr.mxu0 0.0
        %529 = vmatpush1.msra.mxu0 0.0
        %530 = vmatprep.subr.mxu0 0.0
        %531 = vmatpush1.msra.mxu0 0.0
        %532 = vmatprep.subr.mxu0 0.0
        %533 = vmatpush1.msra.mxu0 0.0
        %534 = vmatprep.subr.mxu0 0.0
        %535 = vmatpush1.msra.mxu0 0.0
        %536 = vmatprep.subr.mxu0 0.0
        %537 = vmatpush1.msra.mxu0 0.0
        %538 = vmatprep.subr.mxu0 0.0
        %539 = vmatpush1.msra.mxu0 0.0
        %540 = vmatprep.subr.mxu0 0.0
        %541 = vmatpush1.msra.mxu0 0.0
        %542 = vmatprep.subr.mxu0 0.0
        %543 = vmatpush1.msra.mxu0 0.0
        %544 = vmatprep.subr.mxu0 0.0
        %545 = vmatpush1.msra.mxu0 0.0
        %546 = vmatprep.subr.mxu0 0.0
        %547 = vmatpush1.msra.mxu0 0.0
        %548 = vmatprep.subr.mxu0 0.0
        %549 = vmatpush1.msra.mxu0 0.0
        %550 = vmatprep.mubr.f32.mxu0 0.0
        %551 = vmatmul.mubr.f32.gmra.mrb[0].mxu0 %v484
        %v552 = vpop.f32.mrb[0].mxu0
        %v553 = vadd.f32 0.0, %v552
        %v554 = vpop.f32.mrb[0].mxu0
        %555 = vdwg.mxu0
        %v556 = vmax.f32 %v553, 0.0
        %v557 = vld [vmem:[%s3] sm:$0xff]
        %vm558 = vcmask 64512
        %v560 = vsel %vm558, %v557, 0
        %562 = vmatprep.subr.mxu0 0.0
        %563 = vmatpush1.msra.mxu0 %v372
        %564 = vmatprep.subr.mxu0 0.0
        %565 = vmatpush1.msra.mxu0 0.0
        %566 = vmatprep.subr.mxu0 0.0
        %567 = vmatpush1.msra.mxu0 0.0
        %568 = vmatprep.subr.mxu0 0.0
        %569 = vmatpush1.msra.mxu0 0.0
        %570 = vmatprep.subr.mxu0 0.0
        %571 = vmatpush1.msra.mxu0 0.0
        %572 = vmatprep.subr.mxu0 0.0
        %573 = vmatpush1.msra.mxu0 0.0
        %574 = vmatprep.subr.mxu0 0.0
        %575 = vmatpush1.msra.mxu0 0.0
        %576 = vmatprep.subr.mxu0 0.0
        %577 = vmatpush1.msra.mxu0 0.0
        %578 = vmatprep.subr.mxu0 0.0
        %579 = vmatpush1.msra.mxu0 0.0
        %580 = vmatprep.subr.mxu0 0.0
        %581 = vmatpush1.msra.mxu0 0.0
        %582 = vmatprep.subr.mxu0 0.0
        %583 = vmatpush1.msra.mxu0 0.0
        %584 = vmatprep.subr.mxu0 0.0
        %585 = vmatpush1.msra.mxu0 0.0
        %586 = vmatprep.subr.mxu0 0.0
        %587 = vmatpush1.msra.mxu0 0.0
        %588 = vmatprep.subr.mxu0 0.0
        %589 = vmatpush1.msra.mxu0 0.0
        %590 = vmatprep.subr.mxu0 0.0
        %591 = vmatpush1.msra.mxu0 0.0
        %592 = vmatprep.subr.mxu0 0.0
        %593 = vmatpush1.msra.mxu0 0.0
        %594 = vmatprep.subr.mxu0 0.0
        %595 = vmatpush1.msra.mxu0 0.0
        %596 = vmatprep.subr.mxu0 0.0
        %597 = vmatpush1.msra.mxu0 0.0
        %598 = vmatprep.subr.mxu0 0.0
        %599 = vmatpush1.msra.mxu0 0.0
        %600 = vmatprep.subr.mxu0 0.0
        %601 = vmatpush1.msra.mxu0 0.0
        %602 = vmatprep.subr.mxu0 0.0
        %603 = vmatpush1.msra.mxu0 0.0
        %604 = vmatprep.subr.mxu0 0.0
        %605 = vmatpush1.msra.mxu0 0.0
        %606 = vmatprep.subr.mxu0 0.0
        %607 = vmatpush1.msra.mxu0 0.0
        %608 = vmatprep.subr.mxu0 0.0
        %609 = vmatpush1.msra.mxu0 0.0
        %610 = vmatprep.subr.mxu0 0.0
        %611 = vmatpush1.msra.mxu0 0.0
        %612 = vmatprep.subr.mxu0 0.0
        %613 = vmatpush1.msra.mxu0 0.0
        %614 = vmatprep.subr.mxu0 0.0
        %615 = vmatpush1.msra.mxu0 0.0
        %616 = vmatprep.subr.mxu0 0.0
        %617 = vmatpush1.msra.mxu0 0.0
        %618 = vmatprep.subr.mxu0 0.0
        %619 = vmatpush1.msra.mxu0 0.0
        %620 = vmatprep.subr.mxu0 0.0
        %621 = vmatpush1.msra.mxu0 0.0
        %622 = vmatprep.subr.mxu0 0.0
        %623 = vmatpush1.msra.mxu0 0.0
        %624 = vmatprep.subr.mxu0 0.0
        %625 = vmatpush1.msra.mxu0 0.0
        %626 = vmatprep.mubr.f32.mxu0 0.0
        %627 = vmatmul.mubr.f32.gmra.mrb[0].mxu0 %v560
        %v628 = vpop.f32.mrb[0].mxu0
        %v629 = vadd.f32 0.0, %v628
        %v630 = vpop.f32.mrb[0].mxu0
        %631 = vdwg.mxu0
        %v632 = vadd.f32 %v556, %v629
        %v633 = vmax.f32 %v632, 0.0
        %634 = vst [vmem:[#allocation2 + $0x8] sm:$0xff] %v633
        %v635 = vld [vmem:[#allocation2] sm:$0xff]
        %v636 = vld [vmem:[#allocation2 + $0x8] sm:$0xff]
        %638 = vrot.lane.b32.xlu0 %v636, 126
        %v639 = vpop.permute.xlu0 %638
        %v640 = vld [vmem:[#allocation9] sm:$0xff]
        %642 = vrot.lane.b32.xlu0 %v635, 2
        %v643 = vpop.permute.xlu0 %642
        %644 = vrot.lane.b32.xlu0 %v636, 2
        %v645 = vpop.permute.xlu0 %644
        %646 = vrot.lane.b32.xlu0 %v639, 2
        %v647 = vpop.permute.xlu0 %646
        %vm648 = vcmask 15360
        %v649 = vsel %vm648, %v643, %v645
        %v653 = vsel %vm391, %v640, 0
        %655 = vmatprep.subr.mxu0 0.0
        %656 = vmatpush1.msra.mxu0 %v649
        %657 = vmatprep.subr.mxu0 0.0
        %658 = vmatpush1.msra.mxu0 %v647
        %659 = vmatprep.subr.mxu0 0.0
        %660 = vmatpush1.msra.mxu0 0.0
        %661 = vmatprep.subr.mxu0 0.0
        %662 = vmatpush1.msra.mxu0 0.0
        %663 = vmatprep.subr.mxu0 0.0
        %664 = vmatpush1.msra.mxu0 0.0
        %665 = vmatprep.subr.mxu0 0.0
        %666 = vmatpush1.msra.mxu0 0.0
        %667 = vmatprep.subr.mxu0 0.0
        %668 = vmatpush1.msra.mxu0 0.0
        %669 = vmatprep.subr.mxu0 0.0
        %670 = vmatpush1.msra.mxu0 0.0
        %671 = vmatprep.subr.mxu0 0.0
        %672 = vmatpush1.msra.mxu0 0.0
        %673 = vmatprep.subr.mxu0 0.0
        %674 = vmatpush1.msra.mxu0 0.0
        %675 = vmatprep.subr.mxu0 0.0
        %676 = vmatpush1.msra.mxu0 0.0
        %677 = vmatprep.subr.mxu0 0.0
        %678 = vmatpush1.msra.mxu0 0.0
        %679 = vmatprep.subr.mxu0 0.0
        %680 = vmatpush1.msra.mxu0 0.0
        %681 = vmatprep.subr.mxu0 0.0
        %682 = vmatpush1.msra.mxu0 0.0
        %683 = vmatprep.subr.mxu0 0.0
        %684 = vmatpush1.msra.mxu0 0.0
        %685 = vmatprep.subr.mxu0 0.0
        %686 = vmatpush1.msra.mxu0 0.0
        %687 = vmatprep.subr.mxu0 0.0
        %688 = vmatpush1.msra.mxu0 0.0
        %689 = vmatprep.subr.mxu0 0.0
        %690 = vmatpush1.msra.mxu0 0.0
        %691 = vmatprep.subr.mxu0 0.0
        %692 = vmatpush1.msra.mxu0 0.0
        %693 = vmatprep.subr.mxu0 0.0
        %694 = vmatpush1.msra.mxu0 0.0
        %695 = vmatprep.subr.mxu0 0.0
        %696 = vmatpush1.msra.mxu0 0.0
        %697 = vmatprep.subr.mxu0 0.0
        %698 = vmatpush1.msra.mxu0 0.0
        %699 = vmatprep.subr.mxu0 0.0
        %700 = vmatpush1.msra.mxu0 0.0
        %701 = vmatprep.subr.mxu0 0.0
        %702 = vmatpush1.msra.mxu0 0.0
        %703 = vmatprep.subr.mxu0 0.0
        %704 = vmatpush1.msra.mxu0 0.0
        %705 = vmatprep.subr.mxu0 0.0
        %706 = vmatpush1.msra.mxu0 0.0
        %707 = vmatprep.subr.mxu0 0.0
        %708 = vmatpush1.msra.mxu0 0.0
        %709 = vmatprep.subr.mxu0 0.0
        %710 = vmatpush1.msra.mxu0 0.0
        %711 = vmatprep.subr.mxu0 0.0
        %712 = vmatpush1.msra.mxu0 0.0
        %713 = vmatprep.subr.mxu0 0.0
        %714 = vmatpush1.msra.mxu0 0.0
        %715 = vmatprep.subr.mxu0 0.0
        %716 = vmatpush1.msra.mxu0 0.0
        %717 = vmatprep.subr.mxu0 0.0
        %718 = vmatpush1.msra.mxu0 0.0
        %719 = vmatprep.mubr.f32.mxu0 0.0
        %720 = vmatmul.mubr.f32.gmra.mrb[0].mxu0 %v653
        %v721 = vpop.f32.mrb[0].mxu0
        %v722 = vadd.f32 0.0, %v721
        %v723 = vpop.f32.mrb[0].mxu0
        %724 = vdwg.mxu0
        %v725 = vmax.f32 %v722, 0.0
        %726 = vst [vmem:[#allocation2 + $0x8] sm:$0xff] %v725
        %v727 = vld [vmem:[#allocation2] sm:$0xff]
        %v728 = vld [vmem:[#allocation2 + $0x8] sm:$0xff]
        %730 = vrot.lane.b32.xlu0 %v728, 126
        %v731 = vpop.permute.xlu0 %730
        %v732 = vld [vmem:[%s5] sm:$0xff]
        %734 = vrot.lane.b32.xlu0 %v727, 2
        %v735 = vpop.permute.xlu0 %734
        %736 = vrot.lane.b32.xlu0 %v728, 2
        %v737 = vpop.permute.xlu0 %736
        %738 = vrot.lane.b32.xlu0 %v731, 2
        %v739 = vpop.permute.xlu0 %738
        %v740 = vsel %vm648, %v735, %v737
        %v744 = vsel %vm391, %v732, 0
        %746 = vmatprep.subr.mxu0 0.0
        %747 = vmatpush1.msra.mxu0 %v740
        %748 = vmatprep.subr.mxu0 0.0
        %749 = vmatpush1.msra.mxu0 %v739
        %750 = vmatprep.subr.mxu0 0.0
        %751 = vmatpush1.msra.mxu0 0.0
        %752 = vmatprep.subr.mxu0 0.0
        %753 = vmatpush1.msra.mxu0 0.0
        %754 = vmatprep.subr.mxu0 0.0
        %755 = vmatpush1.msra.mxu0 0.0
        %756 = vmatprep.subr.mxu0 0.0
        %757 = vmatpush1.msra.mxu0 0.0
        %758 = vmatprep.subr.mxu0 0.0
        %759 = vmatpush1.msra.mxu0 0.0
        %760 = vmatprep.subr.mxu0 0.0
        %761 = vmatpush1.msra.mxu0 0.0
        %762 = vmatprep.subr.mxu0 0.0
        %763 = vmatpush1.msra.mxu0 0.0
        %764 = vmatprep.subr.mxu0 0.0
        %765 = vmatpush1.msra.mxu0 0.0
        %766 = vmatprep.subr.mxu0 0.0
        %767 = vmatpush1.msra.mxu0 0.0
        %768 = vmatprep.subr.mxu0 0.0
        %769 = vmatpush1.msra.mxu0 0.0
        %770 = vmatprep.subr.mxu0 0.0
        %771 = vmatpush1.msra.mxu0 0.0
        %772 = vmatprep.subr.mxu0 0.0
        %773 = vmatpush1.msra.mxu0 0.0
        %774 = vmatprep.subr.mxu0 0.0
        %775 = vmatpush1.msra.mxu0 0.0
        %776 = vmatprep.subr.mxu0 0.0
        %777 = vmatpush1.msra.mxu0 0.0
        %778 = vmatprep.subr.mxu0 0.0
        %779 = vmatpush1.msra.mxu0 0.0
        %780 = vmatprep.subr.mxu0 0.0
        %781 = vmatpush1.msra.mxu0 0.0
        %782 = vmatprep.subr.mxu0 0.0
        %783 = vmatpush1.msra.mxu0 0.0
        %784 = vmatprep.subr.mxu0 0.0
        %785 = vmatpush1.msra.mxu0 0.0
        %786 = vmatprep.subr.mxu0 0.0
        %787 = vmatpush1.msra.mxu0 0.0
        %788 = vmatprep.subr.mxu0 0.0
        %789 = vmatpush1.msra.mxu0 0.0
        %790 = vmatprep.subr.mxu0 0.0
        %791 = vmatpush1.msra.mxu0 0.0
        %792 = vmatprep.subr.mxu0 0.0
        %793 = vmatpush1.msra.mxu0 0.0
        %794 = vmatprep.subr.mxu0 0.0
        %795 = vmatpush1.msra.mxu0 0.0
        %796 = vmatprep.subr.mxu0 0.0
        %797 = vmatpush1.msra.mxu0 0.0
        %798 = vmatprep.subr.mxu0 0.0
        %799 = vmatpush1.msra.mxu0 0.0
        %800 = vmatprep.subr.mxu0 0.0
        %801 = vmatpush1.msra.mxu0 0.0
        %802 = vmatprep.subr.mxu0 0.0
        %803 = vmatpush1.msra.mxu0 0.0
        %804 = vmatprep.subr.mxu0 0.0
        %805 = vmatpush1.msra.mxu0 0.0
        %806 = vmatprep.subr.mxu0 0.0
        %807 = vmatpush1.msra.mxu0 0.0
        %808 = vmatprep.subr.mxu0 0.0
        %809 = vmatpush1.msra.mxu0 0.0
        %810 = vmatprep.mubr.f32.mxu0 0.0
        %811 = vmatmul.mubr.f32.gmra.mrb[0].mxu0 %v744
        %v812 = vpop.f32.mrb[0].mxu0
        %v813 = vadd.f32 0.0, %v812
        %v814 = vpop.f32.mrb[0].mxu0
        %815 = vdwg.mxu0
        %v816 = vmax.f32 %v813, 0.0
        %v817 = vadd.f32 %v816, %v633
        %v818 = vmax.f32 %v817, 0.0
        %819 = vst [vmem:[#allocation2 + $0x8] sm:$0xff] %v818
        %v820 = vld [vmem:[#allocation2] sm:$0xff]
        %v821 = vld [vmem:[#allocation2 + $0x8] sm:$0xff]
        %823 = vrot.lane.b32.xlu0 %v821, 124
        %v824 = vpop.permute.xlu0 %823
        %v825 = vld [vmem:[#allocation11] sm:$0xff]
        %827 = vrot.lane.b32.xlu0 %v820, 4
        %v828 = vpop.permute.xlu0 %827
        %829 = vrot.lane.b32.xlu0 %v821, 4
        %v830 = vpop.permute.xlu0 %829
        %831 = vrot.lane.b32.xlu0 %v824, 4
        %v832 = vpop.permute.xlu0 %831
        %vm833 = vcmask 31744
        %v834 = vsel %vm833, %v828, %v830
        %v838 = vsel %vm391, %v825, 0
        %840 = vmatprep.subr.mxu0 0.0
        %841 = vmatpush1.msra.mxu0 %v834
        %842 = vmatprep.subr.mxu0 0.0
        %843 = vmatpush1.msra.mxu0 %v832
        %844 = vmatprep.subr.mxu0 0.0
        %845 = vmatpush1.msra.mxu0 0.0
        %846 = vmatprep.subr.mxu0 0.0
        %847 = vmatpush1.msra.mxu0 0.0
        %848 = vmatprep.subr.mxu0 0.0
        %849 = vmatpush1.msra.mxu0 0.0
        %850 = vmatprep.subr.mxu0 0.0
        %851 = vmatpush1.msra.mxu0 0.0
        %852 = vmatprep.subr.mxu0 0.0
        %853 = vmatpush1.msra.mxu0 0.0
        %854 = vmatprep.subr.mxu0 0.0
        %855 = vmatpush1.msra.mxu0 0.0
        %856 = vmatprep.subr.mxu0 0.0
        %857 = vmatpush1.msra.mxu0 0.0
        %858 = vmatprep.subr.mxu0 0.0
        %859 = vmatpush1.msra.mxu0 0.0
        %860 = vmatprep.subr.mxu0 0.0
        %861 = vmatpush1.msra.mxu0 0.0
        %862 = vmatprep.subr.mxu0 0.0
        %863 = vmatpush1.msra.mxu0 0.0
        %864 = vmatprep.subr.mxu0 0.0
        %865 = vmatpush1.msra.mxu0 0.0
        %866 = vmatprep.subr.mxu0 0.0
        %867 = vmatpush1.msra.mxu0 0.0
        %868 = vmatprep.subr.mxu0 0.0
        %869 = vmatpush1.msra.mxu0 0.0
        %870 = vmatprep.subr.mxu0 0.0
        %871 = vmatpush1.msra.mxu0 0.0
        %872 = vmatprep.subr.mxu0 0.0
        %873 = vmatpush1.msra.mxu0 0.0
        %874 = vmatprep.subr.mxu0 0.0
        %875 = vmatpush1.msra.mxu0 0.0
        %876 = vmatprep.subr.mxu0 0.0
        %877 = vmatpush1.msra.mxu0 0.0
        %878 = vmatprep.subr.mxu0 0.0
        %879 = vmatpush1.msra.mxu0 0.0
        %880 = vmatprep.subr.mxu0 0.0
        %881 = vmatpush1.msra.mxu0 0.0
        %882 = vmatprep.subr.mxu0 0.0
        %883 = vmatpush1.msra.mxu0 0.0
        %884 = vmatprep.subr.mxu0 0.0
        %885 = vmatpush1.msra.mxu0 0.0
        %886 = vmatprep.subr.mxu0 0.0
        %887 = vmatpush1.msra.mxu0 0.0
        %888 = vmatprep.subr.mxu0 0.0
        %889 = vmatpush1.msra.mxu0 0.0
        %890 = vmatprep.subr.mxu0 0.0
        %891 = vmatpush1.msra.mxu0 0.0
        %892 = vmatprep.subr.mxu0 0.0
        %893 = vmatpush1.msra.mxu0 0.0
        %894 = vmatprep.subr.mxu0 0.0
        %895 = vmatpush1.msra.mxu0 0.0
        %896 = vmatprep.subr.mxu0 0.0
        %897 = vmatpush1.msra.mxu0 0.0
        %898 = vmatprep.subr.mxu0 0.0
        %899 = vmatpush1.msra.mxu0 0.0
        %900 = vmatprep.subr.mxu0 0.0
        %901 = vmatpush1.msra.mxu0 0.0
        %902 = vmatprep.subr.mxu0 0.0
        %903 = vmatpush1.msra.mxu0 0.0
        %904 = vmatprep.mubr.f32.mxu0 0.0
        %905 = vmatmul.mubr.f32.gmra.mrb[0].mxu0 %v838
        %v906 = vpop.f32.mrb[0].mxu0
        %v907 = vadd.f32 0.0, %v906
        %v908 = vpop.f32.mrb[0].mxu0
        %909 = vdwg.mxu0
        %v910 = vmax.f32 %v907, 0.0
        %911 = vst [vmem:[#allocation2 + $0x8] sm:$0xff] %v910
        %v912 = vld [vmem:[#allocation2] sm:$0xff]
        %v913 = vld [vmem:[#allocation2 + $0x8] sm:$0xff]
        %915 = vrot.lane.b32.xlu0 %v913, 124
        %v916 = vpop.permute.xlu0 %915
        %v917 = vld [vmem:[%s7] sm:$0xff]
        %919 = vrot.lane.b32.xlu0 %v912, 4
        %v920 = vpop.permute.xlu0 %919
        %921 = vrot.lane.b32.xlu0 %v913, 4
        %v922 = vpop.permute.xlu0 %921
        %923 = vrot.lane.b32.xlu0 %v916, 4
        %v924 = vpop.permute.xlu0 %923
        %v925 = vsel %vm833, %v920, %v922
        %v929 = vsel %vm391, %v917, 0
        %931 = vmatprep.subr.mxu0 0.0
        %932 = vmatpush1.msra.mxu0 %v925
        %933 = vmatprep.subr.mxu0 0.0
        %934 = vmatpush1.msra.mxu0 %v924
        %935 = vmatprep.subr.mxu0 0.0
        %936 = vmatpush1.msra.mxu0 0.0
        %937 = vmatprep.subr.mxu0 0.0
        %938 = vmatpush1.msra.mxu0 0.0
        %939 = vmatprep.subr.mxu0 0.0
        %940 = vmatpush1.msra.mxu0 0.0
        %941 = vmatprep.subr.mxu0 0.0
        %942 = vmatpush1.msra.mxu0 0.0
        %943 = vmatprep.subr.mxu0 0.0
        %944 = vmatpush1.msra.mxu0 0.0
        %945 = vmatprep.subr.mxu0 0.0
        %946 = vmatpush1.msra.mxu0 0.0
        %947 = vmatprep.subr.mxu0 0.0
        %948 = vmatpush1.msra.mxu0 0.0
        %949 = vmatprep.subr.mxu0 0.0
        %950 = vmatpush1.msra.mxu0 0.0
        %951 = vmatprep.subr.mxu0 0.0
        %952 = vmatpush1.msra.mxu0 0.0
        %953 = vmatprep.subr.mxu0 0.0
        %954 = vmatpush1.msra.mxu0 0.0
        %955 = vmatprep.subr.mxu0 0.0
        %956 = vmatpush1.msra.mxu0 0.0
        %957 = vmatprep.subr.mxu0 0.0
        %958 = vmatpush1.msra.mxu0 0.0
        %959 = vmatprep.subr.mxu0 0.0
        %960 = vmatpush1.msra.mxu0 0.0
        %961 = vmatprep.subr.mxu0 0.0
        %962 = vmatpush1.msra.mxu0 0.0
        %963 = vmatprep.subr.mxu0 0.0
        %964 = vmatpush1.msra.mxu0 0.0
        %965 = vmatprep.subr.mxu0 0.0
        %966 = vmatpush1.msra.mxu0 0.0
        %967 = vmatprep.subr.mxu0 0.0
        %968 = vmatpush1.msra.mxu0 0.0
        %969 = vmatprep.subr.mxu0 0.0
        %970 = vmatpush1.msra.mxu0 0.0
        %971 = vmatprep.subr.mxu0 0.0
        %972 = vmatpush1.msra.mxu0 0.0
        %973 = vmatprep.subr.mxu0 0.0
        %974 = vmatpush1.msra.mxu0 0.0
        %975 = vmatprep.subr.mxu0 0.0
        %976 = vmatpush1.msra.mxu0 0.0
        %977 = vmatprep.subr.mxu0 0.0
        %978 = vmatpush1.msra.mxu0 0.0
        %979 = vmatprep.subr.mxu0 0.0
        %980 = vmatpush1.msra.mxu0 0.0
        %981 = vmatprep.subr.mxu0 0.0
        %982 = vmatpush1.msra.mxu0 0.0
        %983 = vmatprep.subr.mxu0 0.0
        %984 = vmatpush1.msra.mxu0 0.0
        %985 = vmatprep.subr.mxu0 0.0
        %986 = vmatpush1.msra.mxu0 0.0
        %987 = vmatprep.subr.mxu0 0.0
        %988 = vmatpush1.msra.mxu0 0.0
        %989 = vmatprep.subr.mxu0 0.0
        %990 = vmatpush1.msra.mxu0 0.0
        %991 = vmatprep.subr.mxu0 0.0
        %992 = vmatpush1.msra.mxu0 0.0
        %993 = vmatprep.subr.mxu0 0.0
        %994 = vmatpush1.msra.mxu0 0.0
        %995 = vmatprep.mubr.f32.mxu0 0.0
        %996 = vmatmul.mubr.f32.gmra.mrb[0].mxu0 %v929
        %v997 = vpop.f32.mrb[0].mxu0
        %v998 = vadd.f32 0.0, %v997
        %v999 = vpop.f32.mrb[0].mxu0
        %1000 = vdwg.mxu0
        %v1001 = vmax.f32 %v998, 0.0
        %v1002 = vadd.f32 %v1001, %v818
        %v1003 = vmax.f32 %v1002, 0.0
        %1004 = vst [vmem:[%s370] sm:$0xff] %v1003
        %s1005 = sand.u32 %s208, 1
        %s1006 = scalar_lea.sflag [#allocation5], %s1005
        %s1007 = sand.u32 %s208, 1
        %s1008 = smul.addr %s1007, 8
        %s1009 = scalar_lea.vmem [#allocation12], %s1008
        // Predicated region
        $region73: #{tpu_custom_call.1} parent=51 // pred_check
          %p1010 = pneg %p218
        $region74: #{tpu_custom_call.1} parent=51 // pred_check_branch
          %1012 = sbr.rel (%p1010) target = $region76
        $region75: #{tpu_custom_call.1} parent=51 // pred_region
          %s1014 = ssub.s32 128, 128
          %1015 = vsyncadd %s1006, %s1014
          %s1016 = smul.addr %s27, 128
          %s1017 = scalar_lea.hbm %s8, %s1016
          %s1019 = sshll.u32 %s1009, 4
          %s1020 = int_to_ptr.vmem [resolvable:$true] %s1019
          %1022 = dma.vmem_to_hbm [thread:$0]  %s1020, 128, %s1017, %s1006
        $region76: #{tpu_custom_call.1} parent=51 // pred_fallthru
          _
      $region52: #{tpu_custom_call.1} parent=5 // pred_fallthru
        _
      %p1023 = scmp.le.s32.totalorder 2, %s22
      // Predicated region
      $region77: #{tpu_custom_call.1} parent=5 // pred_check
        %p1024 = pneg %p1023
      $region78: #{tpu_custom_call.1} parent=5 // pred_check_branch
        %1026 = sbr.rel (%p1024) target = $region80
      $region79: #{tpu_custom_call.1} parent=5 // pred_region
        %s1027 = ssub.s32 %s22, 2
        // Predicated region
        $region81: #{tpu_custom_call.1} parent=79 // pred_check
          %p1028 = pneg %p224
        $region82: #{tpu_custom_call.1} parent=79 // pred_check_branch
          %1030 = sbr.rel (%p1028) target = $region84
        $region83: #{tpu_custom_call.1} parent=79 // pred_region
          %s1031 = sand.u32 %s209, 1
          %s1032 = scalar_lea.sflag [#allocation5], %s1031
          %s1033 = sand.u32 %s209, 1
          %s1034 = smul.addr %s1033, 8
          %s1035 = scalar_lea.vmem [#allocation12], %s1034
          %1036 = dma.done %s1032, 128
        $region84: #{tpu_custom_call.1} parent=79 // pred_fallthru
          _
      $region80: #{tpu_custom_call.1} parent=5 // pred_fallthru
        _
    $region6: #{tpu_custom_call.1} parent=1 // loop_footer
      %s26 = sadd.s32 1, %s22
    $region7: #{tpu_custom_call.1} parent=1 // loop_footer_branch
      %21 = sbr.rel target = $region3
    $region8: #{tpu_custom_call.1} parent=1 // loop_exit
      _
    %1037 = vsyncpa [#allocation4], 1
    %s1038 = scalar_lea.sflag [#allocation4], 1
    %1039 = vsyncpa %s1038, 1
    %1040 = vsyncpa [#allocation7], 1
    %1041 = vsyncpa [#allocation10], 1
    %1042 = vsyncpa [#allocation5], 1
    %s1043 = scalar_lea.sflag [#allocation5], 1
    %1044 = vsyncpa %s1043, 1

</llo_original>
